<compile_context>
chip_gen: v5e
topology: v5e:2x2
jax: 0.10.0
libtpu: 0.0.40
codegen_flags: <defaults>
</compile_context>

<pallas_src>
import jax
import jax.numpy as jnp
from jax.experimental import pallas as pl
from jax.experimental.pallas import tpu as pltpu

LANE = 128


def _mlp_kernel(x_ref, w1_ref, b1_ref, w2_ref, b2_ref, o_ref):
    # x_ref:  (F_in, TB, 128) f32 in VMEM   (batch on sublane x lane -> dense vregs)
    # w*_ref: small (out, in) f32 in SMEM   (scalar reads, broadcast by the VPU)
    # o_ref:  (F_out, TB, 128) f32 in VMEM
    f_in = x_ref.shape[0]
    f_hid = w1_ref.shape[0]
    f_out = w2_ref.shape[0]

    # Load all dense (TB, 128) batch planes once.
    xs = [x_ref[k] for k in range(f_in)]

    # fc1 + bias + ReLU: pure VPU scalar*vector FMAs (no MXU).
    hs = []
    for j in range(f_hid):
        acc = xs[0] * w1_ref[j, 0]
        for k in range(1, f_in):
            acc = acc + xs[k] * w1_ref[j, k]
        hs.append(jnp.maximum(acc + b1_ref[j], 0.0))

    # fc2 + bias, lane-dense stores (full 128-lane planes).
    for i in range(f_out):
        acc = hs[0] * w2_ref[i, 0]
        for j in range(1, f_hid):
            acc = acc + hs[j] * w2_ref[i, j]
        o_ref[i] = (acc + b2_ref[i]).astype(o_ref.dtype)


def net_forward(x, w1, b1, w2, b2, *, tile_rows=256):
    """Pallas implementation of Net.forward.

    x : (B, 7) f32; w1 (5, 7), b1 (5,), w2 (2, 5), b2 (2,)  (PyTorch layout).
    Returns (B, 2) f32.
    """
    x = x.astype(jnp.float32)
    B, f_in = x.shape
    f_hid = w1.shape[0]
    f_out = w2.shape[0]

    # Batch -> (sublane rows R, 128 lanes); tile R in chunks of `tb`.
    R = pl.cdiv(B, LANE)
    tb = tile_rows if R >= tile_rows else max(8, ((R + 7) // 8) * 8)
    R_pad = pl.cdiv(R, tb) * tb
    B_pad = R_pad * LANE

    x_t = jnp.transpose(x)                                  # (7, B)
    x_t = jnp.pad(x_t, ((0, 0), (0, B_pad - B)))            # (7, B_pad)
    x_3d = x_t.reshape(f_in, R_pad, LANE)                   # lane-dense layout

    grid = (R_pad // tb,)

    flops = 2 * B * (f_in * f_hid + f_hid * f_out)
    bytes_accessed = (
        B_pad * (f_in + f_out) * 4
        + (w1.size + b1.size + w2.size + b2.size) * 4
    )

    out_3d = pl.pallas_call(
        _mlp_kernel,
        out_shape=jax.ShapeDtypeStruct((f_out, R_pad, LANE), jnp.float32),
        grid=grid,
        in_specs=[
            pl.BlockSpec((f_in, tb, LANE), lambda i: (0, i, 0)),
            pl.BlockSpec(memory_space=pltpu.MemorySpace.SMEM),  # w1 (5,7)
            pl.BlockSpec(memory_space=pltpu.MemorySpace.SMEM),  # b1 (5,)
            pl.BlockSpec(memory_space=pltpu.MemorySpace.SMEM),  # w2 (2,5)
            pl.BlockSpec(memory_space=pltpu.MemorySpace.SMEM),  # b2 (2,)
        ],
        out_specs=pl.BlockSpec((f_out, tb, LANE), lambda i: (0, i, 0)),
        compiler_params=pltpu.CompilerParams(
            dimension_semantics=("parallel",),
        ),
        cost_estimate=pl.CostEstimate(
            flops=int(flops), transcendentals=0, bytes_accessed=int(bytes_accessed)
        ),
    )(x_3d, w1, b1, w2, b2)

    out = out_3d.reshape(f_out, B_pad)[:, :B]                # (2, B)
    return jnp.transpose(out)                                # (B, 2)


def init_params(key):
    """nn.Linear-style init, PyTorch weight layout (out_features, in_features)."""
    k1, k2, k3, k4 = jax.random.split(key, 4)
    bound1 = 1.0 / jnp.sqrt(7.0)
    bound2 = 1.0 / jnp.sqrt(5.0)
    w1 = jax.random.uniform(k1, (5, 7), jnp.float32, -bound1, bound1)
    b1 = jax.random.uniform(k2, (5,), jnp.float32, -bound1, bound1)
    w2 = jax.random.uniform(k3, (2, 5), jnp.float32, -bound2, bound2)
    b2 = jax.random.uniform(k4, (2,), jnp.float32, -bound2, bound2)
    return w1, b1, w2, b2


if __name__ == "__main__":
    key = jax.random.PRNGKey(0)
    k_params, k_x = jax.random.split(key)
    w1, b1, w2, b2 = init_params(k_params)

    batch = 8
    x = jax.random.normal(k_x, (batch, 7), jnp.float32)

    out = net_forward(x, w1, b1, w2, b2)
    out = jax.block_until_ready(out)

    # Pure-JAX reference: relu(x @ W1.T + b1) @ W2.T + b2
    ref = jnp.maximum(x @ w1.T + b1, 0.0) @ w2.T + b2
    assert out.shape == (batch, 2)
    assert jnp.allclose(out, ref, atol=1e-5, rtol=1e-5)

    print("KERNEL_OK")
</pallas_src>

<mosaic_0001>
module attributes {stable_mosaic.version = 11 : i64} {
  func.func @_mlp_kernel(%arg0: i32, %arg1: memref<7x8x128xf32, #tpu.memory_space<vmem>>, %arg2: memref<5x7xf32, #tpu.memory_space<smem>>, %arg3: memref<5xf32, #tpu.memory_space<smem>>, %arg4: memref<2x5xf32, #tpu.memory_space<smem>>, %arg5: memref<2xf32, #tpu.memory_space<smem>>, %arg6: memref<2x8x128xf32, #tpu.memory_space<vmem>>) attributes {dimension_semantics = [#tpu.dimension_semantics<parallel>], iteration_bounds = array<i64: 1>, scalar_prefetch = 0 : i64, scratch_operands = 0 : i64, tpu.core_type = #tpu.core_type<tc>, window_params = [{transform_indices = @transform_0, window_bounds = array<i64: 7, 8, 128>}, {transform_indices = @transform_1, window_bounds = array<i64: 5, 7>}, {transform_indices = @transform_2, window_bounds = array<i64: 5>}, {transform_indices = @transform_3, window_bounds = array<i64: 2, 5>}, {transform_indices = @transform_4, window_bounds = array<i64: 2>}, {transform_indices = @transform_5, window_bounds = array<i64: 2, 8, 128>}]} {
    %c0 = arith.constant 0 : index
    %c0_0 = arith.constant 0 : index
    %c0_1 = arith.constant 0 : index
    %0 = vector.load %arg1[%c0, %c0_0, %c0_1] : memref<7x8x128xf32, #tpu.memory_space<vmem>>, vector<1x8x128xf32>
    %1 = vector.shape_cast %0 : vector<1x8x128xf32> to vector<8x128xf32>
    %c1 = arith.constant 1 : index
    %c0_2 = arith.constant 0 : index
    %c0_3 = arith.constant 0 : index
    %2 = vector.load %arg1[%c1, %c0_2, %c0_3] : memref<7x8x128xf32, #tpu.memory_space<vmem>>, vector<1x8x128xf32>
    %3 = vector.shape_cast %2 : vector<1x8x128xf32> to vector<8x128xf32>
    %c2 = arith.constant 2 : index
    %c0_4 = arith.constant 0 : index
    %c0_5 = arith.constant 0 : index
    %4 = vector.load %arg1[%c2, %c0_4, %c0_5] : memref<7x8x128xf32, #tpu.memory_space<vmem>>, vector<1x8x128xf32>
    %5 = vector.shape_cast %4 : vector<1x8x128xf32> to vector<8x128xf32>
    %c3 = arith.constant 3 : index
    %c0_6 = arith.constant 0 : index
    %c0_7 = arith.constant 0 : index
    %6 = vector.load %arg1[%c3, %c0_6, %c0_7] : memref<7x8x128xf32, #tpu.memory_space<vmem>>, vector<1x8x128xf32>
    %7 = vector.shape_cast %6 : vector<1x8x128xf32> to vector<8x128xf32>
    %c4 = arith.constant 4 : index
    %c0_8 = arith.constant 0 : index
    %c0_9 = arith.constant 0 : index
    %8 = vector.load %arg1[%c4, %c0_8, %c0_9] : memref<7x8x128xf32, #tpu.memory_space<vmem>>, vector<1x8x128xf32>
    %9 = vector.shape_cast %8 : vector<1x8x128xf32> to vector<8x128xf32>
    %c5 = arith.constant 5 : index
    %c0_10 = arith.constant 0 : index
    %c0_11 = arith.constant 0 : index
    %10 = vector.load %arg1[%c5, %c0_10, %c0_11] : memref<7x8x128xf32, #tpu.memory_space<vmem>>, vector<1x8x128xf32>
    %11 = vector.shape_cast %10 : vector<1x8x128xf32> to vector<8x128xf32>
    %c6 = arith.constant 6 : index
    %c0_12 = arith.constant 0 : index
    %c0_13 = arith.constant 0 : index
    %12 = vector.load %arg1[%c6, %c0_12, %c0_13] : memref<7x8x128xf32, #tpu.memory_space<vmem>>, vector<1x8x128xf32>
    %13 = vector.shape_cast %12 : vector<1x8x128xf32> to vector<8x128xf32>
    %c0_14 = arith.constant 0 : index
    %c0_15 = arith.constant 0 : index
    %14 = memref.load %arg2[%c0_14, %c0_15] : memref<5x7xf32, #tpu.memory_space<smem>>
    %15 = vector.broadcast %14 : f32 to vector<8x128xf32>
    %16 = arith.mulf %1, %15 : vector<8x128xf32>
    %c0_16 = arith.constant 0 : index
    %c1_17 = arith.constant 1 : index
    %17 = memref.load %arg2[%c0_16, %c1_17] : memref<5x7xf32, #tpu.memory_space<smem>>
    %18 = vector.broadcast %17 : f32 to vector<8x128xf32>
    %19 = arith.mulf %3, %18 : vector<8x128xf32>
    %20 = arith.addf %16, %19 : vector<8x128xf32>
    %c0_18 = arith.constant 0 : index
    %c2_19 = arith.constant 2 : index
    %21 = memref.load %arg2[%c0_18, %c2_19] : memref<5x7xf32, #tpu.memory_space<smem>>
    %22 = vector.broadcast %21 : f32 to vector<8x128xf32>
    %23 = arith.mulf %5, %22 : vector<8x128xf32>
    %24 = arith.addf %20, %23 : vector<8x128xf32>
    %c0_20 = arith.constant 0 : index
    %c3_21 = arith.constant 3 : index
    %25 = memref.load %arg2[%c0_20, %c3_21] : memref<5x7xf32, #tpu.memory_space<smem>>
    %26 = vector.broadcast %25 : f32 to vector<8x128xf32>
    %27 = arith.mulf %7, %26 : vector<8x128xf32>
    %28 = arith.addf %24, %27 : vector<8x128xf32>
    %c0_22 = arith.constant 0 : index
    %c4_23 = arith.constant 4 : index
    %29 = memref.load %arg2[%c0_22, %c4_23] : memref<5x7xf32, #tpu.memory_space<smem>>
    %30 = vector.broadcast %29 : f32 to vector<8x128xf32>
    %31 = arith.mulf %9, %30 : vector<8x128xf32>
    %32 = arith.addf %28, %31 : vector<8x128xf32>
    %c0_24 = arith.constant 0 : index
    %c5_25 = arith.constant 5 : index
    %33 = memref.load %arg2[%c0_24, %c5_25] : memref<5x7xf32, #tpu.memory_space<smem>>
    %34 = vector.broadcast %33 : f32 to vector<8x128xf32>
    %35 = arith.mulf %11, %34 : vector<8x128xf32>
    %36 = arith.addf %32, %35 : vector<8x128xf32>
    %c0_26 = arith.constant 0 : index
    %c6_27 = arith.constant 6 : index
    %37 = memref.load %arg2[%c0_26, %c6_27] : memref<5x7xf32, #tpu.memory_space<smem>>
    %38 = vector.broadcast %37 : f32 to vector<8x128xf32>
    %39 = arith.mulf %13, %38 : vector<8x128xf32>
    %40 = arith.addf %36, %39 : vector<8x128xf32>
    %c0_28 = arith.constant 0 : index
    %41 = memref.load %arg3[%c0_28] : memref<5xf32, #tpu.memory_space<smem>>
    %42 = vector.broadcast %41 : f32 to vector<8x128xf32>
    %43 = arith.addf %40, %42 : vector<8x128xf32>
    %cst = arith.constant 0.000000e+00 : f32
    %44 = vector.broadcast %cst : f32 to vector<8x128xf32>
    %45 = arith.maximumf %43, %44 : vector<8x128xf32>
    %c1_29 = arith.constant 1 : index
    %c0_30 = arith.constant 0 : index
    %46 = memref.load %arg2[%c1_29, %c0_30] : memref<5x7xf32, #tpu.memory_space<smem>>
    %47 = vector.broadcast %46 : f32 to vector<8x128xf32>
    %48 = arith.mulf %1, %47 : vector<8x128xf32>
    %c1_31 = arith.constant 1 : index
    %c1_32 = arith.constant 1 : index
    %49 = memref.load %arg2[%c1_31, %c1_32] : memref<5x7xf32, #tpu.memory_space<smem>>
    %50 = vector.broadcast %49 : f32 to vector<8x128xf32>
    %51 = arith.mulf %3, %50 : vector<8x128xf32>
    %52 = arith.addf %48, %51 : vector<8x128xf32>
    %c1_33 = arith.constant 1 : index
    %c2_34 = arith.constant 2 : index
    %53 = memref.load %arg2[%c1_33, %c2_34] : memref<5x7xf32, #tpu.memory_space<smem>>
    %54 = vector.broadcast %53 : f32 to vector<8x128xf32>
    %55 = arith.mulf %5, %54 : vector<8x128xf32>
    %56 = arith.addf %52, %55 : vector<8x128xf32>
    %c1_35 = arith.constant 1 : index
    %c3_36 = arith.constant 3 : index
    %57 = memref.load %arg2[%c1_35, %c3_36] : memref<5x7xf32, #tpu.memory_space<smem>>
    %58 = vector.broadcast %57 : f32 to vector<8x128xf32>
    %59 = arith.mulf %7, %58 : vector<8x128xf32>
    %60 = arith.addf %56, %59 : vector<8x128xf32>
    %c1_37 = arith.constant 1 : index
    %c4_38 = arith.constant 4 : index
    %61 = memref.load %arg2[%c1_37, %c4_38] : memref<5x7xf32, #tpu.memory_space<smem>>
    %62 = vector.broadcast %61 : f32 to vector<8x128xf32>
    %63 = arith.mulf %9, %62 : vector<8x128xf32>
    %64 = arith.addf %60, %63 : vector<8x128xf32>
    %c1_39 = arith.constant 1 : index
    %c5_40 = arith.constant 5 : index
    %65 = memref.load %arg2[%c1_39, %c5_40] : memref<5x7xf32, #tpu.memory_space<smem>>
    %66 = vector.broadcast %65 : f32 to vector<8x128xf32>
    %67 = arith.mulf %11, %66 : vector<8x128xf32>
    %68 = arith.addf %64, %67 : vector<8x128xf32>
    %c1_41 = arith.constant 1 : index
    %c6_42 = arith.constant 6 : index
    %69 = memref.load %arg2[%c1_41, %c6_42] : memref<5x7xf32, #tpu.memory_space<smem>>
    %70 = vector.broadcast %69 : f32 to vector<8x128xf32>
    %71 = arith.mulf %13, %70 : vector<8x128xf32>
    %72 = arith.addf %68, %71 : vector<8x128xf32>
    %c1_43 = arith.constant 1 : index
    %73 = memref.load %arg3[%c1_43] : memref<5xf32, #tpu.memory_space<smem>>
    %74 = vector.broadcast %73 : f32 to vector<8x128xf32>
    %75 = arith.addf %72, %74 : vector<8x128xf32>
    %cst_44 = arith.constant 0.000000e+00 : f32
    %76 = vector.broadcast %cst_44 : f32 to vector<8x128xf32>
    %77 = arith.maximumf %75, %76 : vector<8x128xf32>
    %c2_45 = arith.constant 2 : index
    %c0_46 = arith.constant 0 : index
    %78 = memref.load %arg2[%c2_45, %c0_46] : memref<5x7xf32, #tpu.memory_space<smem>>
    %79 = vector.broadcast %78 : f32 to vector<8x128xf32>
    %80 = arith.mulf %1, %79 : vector<8x128xf32>
    %c2_47 = arith.constant 2 : index
    %c1_48 = arith.constant 1 : index
    %81 = memref.load %arg2[%c2_47, %c1_48] : memref<5x7xf32, #tpu.memory_space<smem>>
    %82 = vector.broadcast %81 : f32 to vector<8x128xf32>
    %83 = arith.mulf %3, %82 : vector<8x128xf32>
    %84 = arith.addf %80, %83 : vector<8x128xf32>
    %c2_49 = arith.constant 2 : index
    %c2_50 = arith.constant 2 : index
    %85 = memref.load %arg2[%c2_49, %c2_50] : memref<5x7xf32, #tpu.memory_space<smem>>
    %86 = vector.broadcast %85 : f32 to vector<8x128xf32>
    %87 = arith.mulf %5, %86 : vector<8x128xf32>
    %88 = arith.addf %84, %87 : vector<8x128xf32>
    %c2_51 = arith.constant 2 : index
    %c3_52 = arith.constant 3 : index
    %89 = memref.load %arg2[%c2_51, %c3_52] : memref<5x7xf32, #tpu.memory_space<smem>>
    %90 = vector.broadcast %89 : f32 to vector<8x128xf32>
    %91 = arith.mulf %7, %90 : vector<8x128xf32>
    %92 = arith.addf %88, %91 : vector<8x128xf32>
    %c2_53 = arith.constant 2 : index
    %c4_54 = arith.constant 4 : index
    %93 = memref.load %arg2[%c2_53, %c4_54] : memref<5x7xf32, #tpu.memory_space<smem>>
    %94 = vector.broadcast %93 : f32 to vector<8x128xf32>
    %95 = arith.mulf %9, %94 : vector<8x128xf32>
    %96 = arith.addf %92, %95 : vector<8x128xf32>
    %c2_55 = arith.constant 2 : index
    %c5_56 = arith.constant 5 : index
    %97 = memref.load %arg2[%c2_55, %c5_56] : memref<5x7xf32, #tpu.memory_space<smem>>
    %98 = vector.broadcast %97 : f32 to vector<8x128xf32>
    %99 = arith.mulf %11, %98 : vector<8x128xf32>
    %100 = arith.addf %96, %99 : vector<8x128xf32>
    %c2_57 = arith.constant 2 : index
    %c6_58 = arith.constant 6 : index
    %101 = memref.load %arg2[%c2_57, %c6_58] : memref<5x7xf32, #tpu.memory_space<smem>>
    %102 = vector.broadcast %101 : f32 to vector<8x128xf32>
    %103 = arith.mulf %13, %102 : vector<8x128xf32>
    %104 = arith.addf %100, %103 : vector<8x128xf32>
    %c2_59 = arith.constant 2 : index
    %105 = memref.load %arg3[%c2_59] : memref<5xf32, #tpu.memory_space<smem>>
    %106 = vector.broadcast %105 : f32 to vector<8x128xf32>
    %107 = arith.addf %104, %106 : vector<8x128xf32>
    %cst_60 = arith.constant 0.000000e+00 : f32
    %108 = vector.broadcast %cst_60 : f32 to vector<8x128xf32>
    %109 = arith.maximumf %107, %108 : vector<8x128xf32>
    %c3_61 = arith.constant 3 : index
    %c0_62 = arith.constant 0 : index
    %110 = memref.load %arg2[%c3_61, %c0_62] : memref<5x7xf32, #tpu.memory_space<smem>>
    %111 = vector.broadcast %110 : f32 to vector<8x128xf32>
    %112 = arith.mulf %1, %111 : vector<8x128xf32>
    %c3_63 = arith.constant 3 : index
    %c1_64 = arith.constant 1 : index
    %113 = memref.load %arg2[%c3_63, %c1_64] : memref<5x7xf32, #tpu.memory_space<smem>>
    %114 = vector.broadcast %113 : f32 to vector<8x128xf32>
    %115 = arith.mulf %3, %114 : vector<8x128xf32>
    %116 = arith.addf %112, %115 : vector<8x128xf32>
    %c3_65 = arith.constant 3 : index
    %c2_66 = arith.constant 2 : index
    %117 = memref.load %arg2[%c3_65, %c2_66] : memref<5x7xf32, #tpu.memory_space<smem>>
    %118 = vector.broadcast %117 : f32 to vector<8x128xf32>
    %119 = arith.mulf %5, %118 : vector<8x128xf32>
    %120 = arith.addf %116, %119 : vector<8x128xf32>
    %c3_67 = arith.constant 3 : index
    %c3_68 = arith.constant 3 : index
    %121 = memref.load %arg2[%c3_67, %c3_68] : memref<5x7xf32, #tpu.memory_space<smem>>
    %122 = vector.broadcast %121 : f32 to vector<8x128xf32>
    %123 = arith.mulf %7, %122 : vector<8x128xf32>
    %124 = arith.addf %120, %123 : vector<8x128xf32>
    %c3_69 = arith.constant 3 : index
    %c4_70 = arith.constant 4 : index
    %125 = memref.load %arg2[%c3_69, %c4_70] : memref<5x7xf32, #tpu.memory_space<smem>>
    %126 = vector.broadcast %125 : f32 to vector<8x128xf32>
    %127 = arith.mulf %9, %126 : vector<8x128xf32>
    %128 = arith.addf %124, %127 : vector<8x128xf32>
    %c3_71 = arith.constant 3 : index
    %c5_72 = arith.constant 5 : index
    %129 = memref.load %arg2[%c3_71, %c5_72] : memref<5x7xf32, #tpu.memory_space<smem>>
    %130 = vector.broadcast %129 : f32 to vector<8x128xf32>
    %131 = arith.mulf %11, %130 : vector<8x128xf32>
    %132 = arith.addf %128, %131 : vector<8x128xf32>
    %c3_73 = arith.constant 3 : index
    %c6_74 = arith.constant 6 : index
    %133 = memref.load %arg2[%c3_73, %c6_74] : memref<5x7xf32, #tpu.memory_space<smem>>
    %134 = vector.broadcast %133 : f32 to vector<8x128xf32>
    %135 = arith.mulf %13, %134 : vector<8x128xf32>
    %136 = arith.addf %132, %135 : vector<8x128xf32>
    %c3_75 = arith.constant 3 : index
    %137 = memref.load %arg3[%c3_75] : memref<5xf32, #tpu.memory_space<smem>>
    %138 = vector.broadcast %137 : f32 to vector<8x128xf32>
    %139 = arith.addf %136, %138 : vector<8x128xf32>
    %cst_76 = arith.constant 0.000000e+00 : f32
    %140 = vector.broadcast %cst_76 : f32 to vector<8x128xf32>
    %141 = arith.maximumf %139, %140 : vector<8x128xf32>
    %c4_77 = arith.constant 4 : index
    %c0_78 = arith.constant 0 : index
    %142 = memref.load %arg2[%c4_77, %c0_78] : memref<5x7xf32, #tpu.memory_space<smem>>
    %143 = vector.broadcast %142 : f32 to vector<8x128xf32>
    %144 = arith.mulf %1, %143 : vector<8x128xf32>
    %c4_79 = arith.constant 4 : index
    %c1_80 = arith.constant 1 : index
    %145 = memref.load %arg2[%c4_79, %c1_80] : memref<5x7xf32, #tpu.memory_space<smem>>
    %146 = vector.broadcast %145 : f32 to vector<8x128xf32>
    %147 = arith.mulf %3, %146 : vector<8x128xf32>
    %148 = arith.addf %144, %147 : vector<8x128xf32>
    %c4_81 = arith.constant 4 : index
    %c2_82 = arith.constant 2 : index
    %149 = memref.load %arg2[%c4_81, %c2_82] : memref<5x7xf32, #tpu.memory_space<smem>>
    %150 = vector.broadcast %149 : f32 to vector<8x128xf32>
    %151 = arith.mulf %5, %150 : vector<8x128xf32>
    %152 = arith.addf %148, %151 : vector<8x128xf32>
    %c4_83 = arith.constant 4 : index
    %c3_84 = arith.constant 3 : index
    %153 = memref.load %arg2[%c4_83, %c3_84] : memref<5x7xf32, #tpu.memory_space<smem>>
    %154 = vector.broadcast %153 : f32 to vector<8x128xf32>
    %155 = arith.mulf %7, %154 : vector<8x128xf32>
    %156 = arith.addf %152, %155 : vector<8x128xf32>
    %c4_85 = arith.constant 4 : index
    %c4_86 = arith.constant 4 : index
    %157 = memref.load %arg2[%c4_85, %c4_86] : memref<5x7xf32, #tpu.memory_space<smem>>
    %158 = vector.broadcast %157 : f32 to vector<8x128xf32>
    %159 = arith.mulf %9, %158 : vector<8x128xf32>
    %160 = arith.addf %156, %159 : vector<8x128xf32>
    %c4_87 = arith.constant 4 : index
    %c5_88 = arith.constant 5 : index
    %161 = memref.load %arg2[%c4_87, %c5_88] : memref<5x7xf32, #tpu.memory_space<smem>>
    %162 = vector.broadcast %161 : f32 to vector<8x128xf32>
    %163 = arith.mulf %11, %162 : vector<8x128xf32>
    %164 = arith.addf %160, %163 : vector<8x128xf32>
    %c4_89 = arith.constant 4 : index
    %c6_90 = arith.constant 6 : index
    %165 = memref.load %arg2[%c4_89, %c6_90] : memref<5x7xf32, #tpu.memory_space<smem>>
    %166 = vector.broadcast %165 : f32 to vector<8x128xf32>
    %167 = arith.mulf %13, %166 : vector<8x128xf32>
    %168 = arith.addf %164, %167 : vector<8x128xf32>
    %c4_91 = arith.constant 4 : index
    %169 = memref.load %arg3[%c4_91] : memref<5xf32, #tpu.memory_space<smem>>
    %170 = vector.broadcast %169 : f32 to vector<8x128xf32>
    %171 = arith.addf %168, %170 : vector<8x128xf32>
    %cst_92 = arith.constant 0.000000e+00 : f32
    %172 = vector.broadcast %cst_92 : f32 to vector<8x128xf32>
    %173 = arith.maximumf %171, %172 : vector<8x128xf32>
    %c0_93 = arith.constant 0 : index
    %c0_94 = arith.constant 0 : index
    %174 = memref.load %arg4[%c0_93, %c0_94] : memref<2x5xf32, #tpu.memory_space<smem>>
    %175 = vector.broadcast %174 : f32 to vector<8x128xf32>
    %176 = arith.mulf %45, %175 : vector<8x128xf32>
    %c0_95 = arith.constant 0 : index
    %c1_96 = arith.constant 1 : index
    %177 = memref.load %arg4[%c0_95, %c1_96] : memref<2x5xf32, #tpu.memory_space<smem>>
    %178 = vector.broadcast %177 : f32 to vector<8x128xf32>
    %179 = arith.mulf %77, %178 : vector<8x128xf32>
    %180 = arith.addf %176, %179 : vector<8x128xf32>
    %c0_97 = arith.constant 0 : index
    %c2_98 = arith.constant 2 : index
    %181 = memref.load %arg4[%c0_97, %c2_98] : memref<2x5xf32, #tpu.memory_space<smem>>
    %182 = vector.broadcast %181 : f32 to vector<8x128xf32>
    %183 = arith.mulf %109, %182 : vector<8x128xf32>
    %184 = arith.addf %180, %183 : vector<8x128xf32>
    %c0_99 = arith.constant 0 : index
    %c3_100 = arith.constant 3 : index
    %185 = memref.load %arg4[%c0_99, %c3_100] : memref<2x5xf32, #tpu.memory_space<smem>>
    %186 = vector.broadcast %185 : f32 to vector<8x128xf32>
    %187 = arith.mulf %141, %186 : vector<8x128xf32>
    %188 = arith.addf %184, %187 : vector<8x128xf32>
    %c0_101 = arith.constant 0 : index
    %c4_102 = arith.constant 4 : index
    %189 = memref.load %arg4[%c0_101, %c4_102] : memref<2x5xf32, #tpu.memory_space<smem>>
    %190 = vector.broadcast %189 : f32 to vector<8x128xf32>
    %191 = arith.mulf %173, %190 : vector<8x128xf32>
    %192 = arith.addf %188, %191 : vector<8x128xf32>
    %c0_103 = arith.constant 0 : index
    %193 = memref.load %arg5[%c0_103] : memref<2xf32, #tpu.memory_space<smem>>
    %194 = vector.broadcast %193 : f32 to vector<8x128xf32>
    %195 = arith.addf %192, %194 : vector<8x128xf32>
    %c0_104 = arith.constant 0 : index
    %c0_105 = arith.constant 0 : index
    %c0_106 = arith.constant 0 : index
    %196 = vector.load %arg6[%c0_104, %c0_105, %c0_106] : memref<2x8x128xf32, #tpu.memory_space<vmem>>, vector<1x8x128xf32>
    %197 = vector.shape_cast %196 : vector<1x8x128xf32> to vector<8x128xf32>
    %198 = vector.shape_cast %195 : vector<8x128xf32> to vector<1x8x128xf32>
    tpu.vector_store %arg6[%c0_104, %c0_105, %c0_106], %198 {strides = array<i32>} : memref<2x8x128xf32, #tpu.memory_space<vmem>>, vector<1x8x128xf32>,
    %c1_107 = arith.constant 1 : index
    %c0_108 = arith.constant 0 : index
    %199 = memref.load %arg4[%c1_107, %c0_108] : memref<2x5xf32, #tpu.memory_space<smem>>
    %200 = vector.broadcast %199 : f32 to vector<8x128xf32>
    %201 = arith.mulf %45, %200 : vector<8x128xf32>
    %c1_109 = arith.constant 1 : index
    %c1_110 = arith.constant 1 : index
    %202 = memref.load %arg4[%c1_109, %c1_110] : memref<2x5xf32, #tpu.memory_space<smem>>
    %203 = vector.broadcast %202 : f32 to vector<8x128xf32>
    %204 = arith.mulf %77, %203 : vector<8x128xf32>
    %205 = arith.addf %201, %204 : vector<8x128xf32>
    %c1_111 = arith.constant 1 : index
    %c2_112 = arith.constant 2 : index
    %206 = memref.load %arg4[%c1_111, %c2_112] : memref<2x5xf32, #tpu.memory_space<smem>>
    %207 = vector.broadcast %206 : f32 to vector<8x128xf32>
    %208 = arith.mulf %109, %207 : vector<8x128xf32>
    %209 = arith.addf %205, %208 : vector<8x128xf32>
    %c1_113 = arith.constant 1 : index
    %c3_114 = arith.constant 3 : index
    %210 = memref.load %arg4[%c1_113, %c3_114] : memref<2x5xf32, #tpu.memory_space<smem>>
    %211 = vector.broadcast %210 : f32 to vector<8x128xf32>
    %212 = arith.mulf %141, %211 : vector<8x128xf32>
    %213 = arith.addf %209, %212 : vector<8x128xf32>
    %c1_115 = arith.constant 1 : index
    %c4_116 = arith.constant 4 : index
    %214 = memref.load %arg4[%c1_115, %c4_116] : memref<2x5xf32, #tpu.memory_space<smem>>
    %215 = vector.broadcast %214 : f32 to vector<8x128xf32>
    %216 = arith.mulf %173, %215 : vector<8x128xf32>
    %217 = arith.addf %213, %216 : vector<8x128xf32>
    %c1_117 = arith.constant 1 : index
    %218 = memref.load %arg5[%c1_117] : memref<2xf32, #tpu.memory_space<smem>>
    %219 = vector.broadcast %218 : f32 to vector<8x128xf32>
    %220 = arith.addf %217, %219 : vector<8x128xf32>
    %c1_118 = arith.constant 1 : index
    %c0_119 = arith.constant 0 : index
    %c0_120 = arith.constant 0 : index
    %221 = vector.load %arg6[%c1_118, %c0_119, %c0_120] : memref<2x8x128xf32, #tpu.memory_space<vmem>>, vector<1x8x128xf32>
    %222 = vector.shape_cast %221 : vector<1x8x128xf32> to vector<8x128xf32>
    %223 = vector.shape_cast %220 : vector<8x128xf32> to vector<1x8x128xf32>
    tpu.vector_store %arg6[%c1_118, %c0_119, %c0_120], %223 {strides = array<i32>} : memref<2x8x128xf32, #tpu.memory_space<vmem>>, vector<1x8x128xf32>,
    return
  }
  func.func @transform_0(%arg0: i32) -> (i32, i32, i32) {
    %c0_i32 = arith.constant 0 : i32
    %c0_i32_0 = arith.constant 0 : i32
    %c0_i32_1 = arith.constant 0 : i32
    return %c0_i32, %arg0, %c0_i32_0 : i32, i32, i32
  }
  func.func @transform_1(%arg0: i32) -> (i32, i32) {
    %c0_i32 = arith.constant 0 : i32
    %c0_i32_0 = arith.constant 0 : i32
    %c0_i32_1 = arith.constant 0 : i32
    return %c0_i32, %c0_i32_0 : i32, i32
  }
  func.func @transform_2(%arg0: i32) -> i32 {
    %c0_i32 = arith.constant 0 : i32
    %c0_i32_0 = arith.constant 0 : i32
    return %c0_i32 : i32
  }
  func.func @transform_3(%arg0: i32) -> (i32, i32) {
    %c0_i32 = arith.constant 0 : i32
    %c0_i32_0 = arith.constant 0 : i32
    %c0_i32_1 = arith.constant 0 : i32
    return %c0_i32, %c0_i32_0 : i32, i32
  }
  func.func @transform_4(%arg0: i32) -> i32 {
    %c0_i32 = arith.constant 0 : i32
    %c0_i32_0 = arith.constant 0 : i32
    return %c0_i32 : i32
  }
  func.func @transform_5(%arg0: i32) -> (i32, i32, i32) {
    %c0_i32 = arith.constant 0 : i32
    %c0_i32_0 = arith.constant 0 : i32
    %c0_i32_1 = arith.constant 0 : i32
    return %c0_i32, %arg0, %c0_i32_0 : i32, i32, i32
  }
}

</mosaic_0001>

<llo_original>
// kernel: tpu_custom_call.1
$region0: #{tpu_custom_call.1}
  #allocation0 [shape = 'u32[]', space=smem, size = 0x4, offset = 0x4, fixed_abs, tag = 'smem constant byte address 0x4 - core index']
  #allocation1 [shape = 'u32[72,128]{1,0:T(1,128)}', space=vmem, size = 0x9000, scoped, tag = 'internal scratch']
  %s0 = inlined_call_operand.hbm [shape: f32[7,8,128], index: 0, kind: input, shape index: {}]
  %s1 = inlined_call_operand.hbm [shape: f32[5,7], index: 1, kind: input, shape index: {}]
  %s2 = inlined_call_operand.hbm [shape: f32[5], index: 2, kind: input, shape index: {}]
  %s3 = inlined_call_operand.vmem [shape: f32[2,5], index: 3, kind: input, shape index: {}]
  %s4 = inlined_call_operand.vmem [shape: f32[2], index: 4, kind: input, shape index: {}]
  %s5 = inlined_call_operand.hbm [shape: f32[2,8,128], index: 5, kind: output, shape index: {}]
  %s6 = sld [smem:[#allocation0]]
  $region50: #{tpu_custom_call.1} parent=0
    _
  %s8 = ssub.s32 1, %s6
  %s9 = scalar_select 0, %s8, %s6
  $region1: #{tpu_custom_call.1} parent=0
    #allocation2 [shape = 'u8[28672]{0}', space=vmem, size = 0x7000, scoped, tag = 'input window, operand 0, single buffered']
    #allocation3 [shape = 's32[1]{0}', space=sflag, size = 0x4, scoped, tag = 'scoped memory for tpu_custom_call.1']
    #allocation4 [shape = 's32[1]{0}', space=sflag, size = 0x4, scoped, tag = 'scoped memory for tpu_custom_call.1']
    #allocation5 [shape = 's32[1]{0}', space=sflag, size = 0x4, scoped, tag = 'scoped memory for tpu_custom_call.1']
    #allocation6 [shape = 's32[1]{0}', space=sflag, size = 0x4, scoped, tag = 'scoped memory for tpu_custom_call.1']
    #allocation7 [shape = 'u8[4096]{0}', space=smem, size = 0x1000, scoped, tag = 'input window, operand 1, single buffered']
    #allocation8 [shape = 'u8[512]{0}', space=smem, size = 0x200, scoped, tag = 'input window, operand 2, single buffered']
    #allocation9 [shape = 's32[1]{0}', space=sflag, size = 0x4, scoped, tag = 'scoped memory for tpu_custom_call.1']
    #allocation10 [shape = 'u8[1024]{0}', space=smem, size = 0x400, scoped, tag = 'input window, operand 3, single buffered']
    #allocation11 [shape = 'u8[512]{0}', space=smem, size = 0x200, scoped, tag = 'input window, operand 4, single buffered']
    #allocation12 [shape = 's32[1]{0}', space=sflag, size = 0x4, scoped, tag = 'scoped memory for tpu_custom_call.1']
    #allocation13 [shape = 'u8[8192]{0}', space=vmem, size = 0x2000, scoped, tag = 'output window, operand 0, single buffered']
    %10 = vsyncpa [#allocation3], 0
    %11 = vsyncpa [#allocation5], 0
    %12 = vsyncpa [#allocation9], 0
    %13 = vsyncpa [#allocation6], 0
    %14 = vsyncpa [#allocation12], 0
    %15 = vsyncpa [#allocation4], 0
    // Predicated region
    $region2: #{tpu_custom_call.1} parent=1 // pred_check
      _
    $region3: #{tpu_custom_call.1} parent=1 // pred_check_branch
      %17 = sbr.rel (0) target = $region5
    $region4: #{tpu_custom_call.1} parent=1 // pred_region
      %19 = vsyncadd [#allocation3], 0
      %s20 = sshll.u32 %s0, 4
      %s21 = int_to_ptr.hbm [resolvable:$true] %s20
      %s22 = sshll.u32 [#allocation2], 4
      %s23 = int_to_ptr.vmem [resolvable:$true] %s22
      %28 = dma.hbm_to_vmem [thread:$0]  %s21, 896, %s23, [#allocation3], 128, 128, 8
    $region5: #{tpu_custom_call.1} parent=1 // pred_fallthru
      _
    // Predicated region
    $region6: #{tpu_custom_call.1} parent=1 // pred_check
      _
    $region7: #{tpu_custom_call.1} parent=1 // pred_check_branch
      %30 = sbr.rel (0) target = $region9
    $region8: #{tpu_custom_call.1} parent=1 // pred_region
      %32 = vsyncadd [#allocation5], 0
      %s34 = sshll.u32 %s1, 4
      %s35 = int_to_ptr.hbm [resolvable:$true] %s34
      %37 = dma.hbm_to_smem %s35, 128, [#allocation7], [#allocation5]
    $region9: #{tpu_custom_call.1} parent=1 // pred_fallthru
      _
    // Predicated region
    $region10: #{tpu_custom_call.1} parent=1 // pred_check
      _
    $region11: #{tpu_custom_call.1} parent=1 // pred_check_branch
      %39 = sbr.rel (0) target = $region13
    $region12: #{tpu_custom_call.1} parent=1 // pred_region
      %41 = vsyncadd [#allocation9], 0
      %s43 = sshll.u32 %s2, 4
      %s44 = int_to_ptr.hbm [resolvable:$true] %s43
      %46 = dma.hbm_to_smem %s44, 16, [#allocation8], [#allocation9]
    $region13: #{tpu_custom_call.1} parent=1 // pred_fallthru
      _
    // Predicated region
    $region14: #{tpu_custom_call.1} parent=1 // pred_check
      _
    $region15: #{tpu_custom_call.1} parent=1 // pred_check_branch
      %48 = sbr.rel (0) target = $region17
    $region16: #{tpu_custom_call.1} parent=1 // pred_region
      %50 = vsyncadd [#allocation6], 0
      %s52 = sshll.u32 %s3, 4
      %s53 = int_to_ptr.vmem [resolvable:$true] %s52
      %55 = dma.vmem_to_smem %s53, 32, [#allocation10], [#allocation6]
    $region17: #{tpu_custom_call.1} parent=1 // pred_fallthru
      _
    // Predicated region
    $region18: #{tpu_custom_call.1} parent=1 // pred_check
      _
    $region19: #{tpu_custom_call.1} parent=1 // pred_check_branch
      %57 = sbr.rel (0) target = $region21
    $region20: #{tpu_custom_call.1} parent=1 // pred_region
      %59 = vsyncadd [#allocation12], 0
      %s61 = sshll.u32 %s4, 4
      %s62 = int_to_ptr.vmem [resolvable:$true] %s61
      %64 = dma.vmem_to_smem %s62, 16, [#allocation11], [#allocation12]
    $region21: #{tpu_custom_call.1} parent=1 // pred_fallthru
      _
    // Predicated region
    $region22: #{tpu_custom_call.1} parent=1 // pred_check
      _
    $region23: #{tpu_custom_call.1} parent=1 // pred_check_branch
      %66 = sbr.rel (0) target = $region25
    $region24: #{tpu_custom_call.1} parent=1 // pred_region
      %68 = dma.done [#allocation3], 896
    $region25: #{tpu_custom_call.1} parent=1 // pred_fallthru
      _
    // Predicated region
    $region26: #{tpu_custom_call.1} parent=1 // pred_check
      _
    $region27: #{tpu_custom_call.1} parent=1 // pred_check_branch
      %70 = sbr.rel (0) target = $region29
    $region28: #{tpu_custom_call.1} parent=1 // pred_region
      %72 = dma.done [#allocation5], 128
    $region29: #{tpu_custom_call.1} parent=1 // pred_fallthru
      _
    // Predicated region
    $region30: #{tpu_custom_call.1} parent=1 // pred_check
      _
    $region31: #{tpu_custom_call.1} parent=1 // pred_check_branch
      %74 = sbr.rel (0) target = $region33
    $region32: #{tpu_custom_call.1} parent=1 // pred_region
      %76 = dma.done [#allocation9], 16
    $region33: #{tpu_custom_call.1} parent=1 // pred_fallthru
      _
    // Predicated region
    $region34: #{tpu_custom_call.1} parent=1 // pred_check
      _
    $region35: #{tpu_custom_call.1} parent=1 // pred_check_branch
      %78 = sbr.rel (0) target = $region37
    $region36: #{tpu_custom_call.1} parent=1 // pred_region
      %80 = dma.done [#allocation6], 32
    $region37: #{tpu_custom_call.1} parent=1 // pred_fallthru
      _
    // Predicated region
    $region38: #{tpu_custom_call.1} parent=1 // pred_check
      _
    $region39: #{tpu_custom_call.1} parent=1 // pred_check_branch
      %82 = sbr.rel (0) target = $region41
    $region40: #{tpu_custom_call.1} parent=1 // pred_region
      %84 = dma.done [#allocation12], 16
    $region41: #{tpu_custom_call.1} parent=1 // pred_fallthru
      _
    %85 = sfence
    %v86 = vld [vmem:[#allocation2] sm:$0xff]
    %s87 = scalar_lea.vmem [#allocation2], 8
    %v88 = vld [vmem:[%s87] sm:$0xff]
    %s89 = scalar_lea.vmem [#allocation2], 16
    %v90 = vld [vmem:[%s89] sm:$0xff]
    %s91 = scalar_lea.vmem [#allocation2], 24
    %v92 = vld [vmem:[%s91] sm:$0xff]
    %s93 = scalar_lea.vmem [#allocation2], 32
    %v94 = vld [vmem:[%s93] sm:$0xff]
    %s95 = scalar_lea.vmem [#allocation2], 40
    %v96 = vld [vmem:[%s95] sm:$0xff]
    %s97 = scalar_lea.vmem [#allocation2], 48
    %v98 = vld [vmem:[%s97] sm:$0xff]
    %s99 = sld [smem:[#allocation7]]
    %v100 = vstv %s99
    %v101 = vmul.f32 %v86, %v100
    %s102 = sld [smem:[#allocation7 + $0x1]]
    %v103 = vstv %s102
    %v104 = vmul.f32 %v88, %v103
    %v105 = vadd.f32 %v101, %v104
    %s106 = sld [smem:[#allocation7 + $0x2]]
    %v107 = vstv %s106
    %v108 = vmul.f32 %v90, %v107
    %v109 = vadd.f32 %v105, %v108
    %s110 = sld [smem:[#allocation7 + $0x3]]
    %v111 = vstv %s110
    %v112 = vmul.f32 %v92, %v111
    %v113 = vadd.f32 %v109, %v112
    %s114 = sld [smem:[#allocation7 + $0x4]]
    %v115 = vstv %s114
    %v116 = vmul.f32 %v94, %v115
    %v117 = vadd.f32 %v113, %v116
    %s118 = sld [smem:[#allocation7 + $0x5]]
    %v119 = vstv %s118
    %v120 = vmul.f32 %v96, %v119
    %v121 = vadd.f32 %v117, %v120
    %s122 = sld [smem:[#allocation7 + $0x6]]
    %v123 = vstv %s122
    %v124 = vmul.f32 %v98, %v123
    %v125 = vadd.f32 %v121, %v124
    %s126 = sld [smem:[#allocation8]]
    %v127 = vstv %s126
    %v128 = vadd.f32 %v125, %v127
    %v129 = vmax.f32 %v128, 0.0
    %s130 = sld [smem:[#allocation7 + $0x80]]
    %v131 = vstv %s130
    %v132 = vmul.f32 %v86, %v131
    %s133 = sld [smem:[#allocation7 + $0x81]]
    %v134 = vstv %s133
    %v135 = vmul.f32 %v88, %v134
    %v136 = vadd.f32 %v132, %v135
    %s137 = sld [smem:[#allocation7 + $0x82]]
    %v138 = vstv %s137
    %v139 = vmul.f32 %v90, %v138
    %v140 = vadd.f32 %v136, %v139
    %s141 = sld [smem:[#allocation7 + $0x83]]
    %v142 = vstv %s141
    %v143 = vmul.f32 %v92, %v142
    %v144 = vadd.f32 %v140, %v143
    %s145 = sld [smem:[#allocation7 + $0x84]]
    %v146 = vstv %s145
    %v147 = vmul.f32 %v94, %v146
    %v148 = vadd.f32 %v144, %v147
    %s149 = sld [smem:[#allocation7 + $0x85]]
    %v150 = vstv %s149
    %v151 = vmul.f32 %v96, %v150
    %v152 = vadd.f32 %v148, %v151
    %s153 = sld [smem:[#allocation7 + $0x86]]
    %v154 = vstv %s153
    %v155 = vmul.f32 %v98, %v154
    %v156 = vadd.f32 %v152, %v155
    %s157 = sld [smem:[#allocation8 + $0x1]]
    %v158 = vstv %s157
    %v159 = vadd.f32 %v156, %v158
    %v160 = vmax.f32 %v159, 0.0
    %s161 = sld [smem:[#allocation7 + $0x100]]
    %v162 = vstv %s161
    %v163 = vmul.f32 %v86, %v162
    %s164 = sld [smem:[#allocation7 + $0x101]]
    %v165 = vstv %s164
    %v166 = vmul.f32 %v88, %v165
    %v167 = vadd.f32 %v163, %v166
    %s168 = sld [smem:[#allocation7 + $0x102]]
    %v169 = vstv %s168
    %v170 = vmul.f32 %v90, %v169
    %v171 = vadd.f32 %v167, %v170
    %s172 = sld [smem:[#allocation7 + $0x103]]
    %v173 = vstv %s172
    %v174 = vmul.f32 %v92, %v173
    %v175 = vadd.f32 %v171, %v174
    %s176 = sld [smem:[#allocation7 + $0x104]]
    %v177 = vstv %s176
    %v178 = vmul.f32 %v94, %v177
    %v179 = vadd.f32 %v175, %v178
    %s180 = sld [smem:[#allocation7 + $0x105]]
    %v181 = vstv %s180
    %v182 = vmul.f32 %v96, %v181
    %v183 = vadd.f32 %v179, %v182
    %s184 = sld [smem:[#allocation7 + $0x106]]
    %v185 = vstv %s184
    %v186 = vmul.f32 %v98, %v185
    %v187 = vadd.f32 %v183, %v186
    %s188 = sld [smem:[#allocation8 + $0x2]]
    %v189 = vstv %s188
    %v190 = vadd.f32 %v187, %v189
    %v191 = vmax.f32 %v190, 0.0
    %s192 = sld [smem:[#allocation7 + $0x180]]
    %v193 = vstv %s192
    %v194 = vmul.f32 %v86, %v193
    %s195 = sld [smem:[#allocation7 + $0x181]]
    %v196 = vstv %s195
    %v197 = vmul.f32 %v88, %v196
    %v198 = vadd.f32 %v194, %v197
    %s199 = sld [smem:[#allocation7 + $0x182]]
    %v200 = vstv %s199
    %v201 = vmul.f32 %v90, %v200
    %v202 = vadd.f32 %v198, %v201
    %s203 = sld [smem:[#allocation7 + $0x183]]
    %v204 = vstv %s203
    %v205 = vmul.f32 %v92, %v204
    %v206 = vadd.f32 %v202, %v205
    %s207 = sld [smem:[#allocation7 + $0x184]]
    %v208 = vstv %s207
    %v209 = vmul.f32 %v94, %v208
    %v210 = vadd.f32 %v206, %v209
    %s211 = sld [smem:[#allocation7 + $0x185]]
    %v212 = vstv %s211
    %v213 = vmul.f32 %v96, %v212
    %v214 = vadd.f32 %v210, %v213
    %s215 = sld [smem:[#allocation7 + $0x186]]
    %v216 = vstv %s215
    %v217 = vmul.f32 %v98, %v216
    %v218 = vadd.f32 %v214, %v217
    %s219 = sld [smem:[#allocation8 + $0x3]]
    %v220 = vstv %s219
    %v221 = vadd.f32 %v218, %v220
    %v222 = vmax.f32 %v221, 0.0
    %s223 = sld [smem:[#allocation7 + $0x200]]
    %v224 = vstv %s223
    %v225 = vmul.f32 %v86, %v224
    %s226 = sld [smem:[#allocation7 + $0x201]]
    %v227 = vstv %s226
    %v228 = vmul.f32 %v88, %v227
    %v229 = vadd.f32 %v225, %v228
    %s230 = sld [smem:[#allocation7 + $0x202]]
    %v231 = vstv %s230
    %v232 = vmul.f32 %v90, %v231
    %v233 = vadd.f32 %v229, %v232
    %s234 = sld [smem:[#allocation7 + $0x203]]
    %v235 = vstv %s234
    %v236 = vmul.f32 %v92, %v235
    %v237 = vadd.f32 %v233, %v236
    %s238 = sld [smem:[#allocation7 + $0x204]]
    %v239 = vstv %s238
    %v240 = vmul.f32 %v94, %v239
    %v241 = vadd.f32 %v237, %v240
    %s242 = sld [smem:[#allocation7 + $0x205]]
    %v243 = vstv %s242
    %v244 = vmul.f32 %v96, %v243
    %v245 = vadd.f32 %v241, %v244
    %s246 = sld [smem:[#allocation7 + $0x206]]
    %v247 = vstv %s246
    %v248 = vmul.f32 %v98, %v247
    %v249 = vadd.f32 %v245, %v248
    %s250 = sld [smem:[#allocation8 + $0x4]]
    %v251 = vstv %s250
    %v252 = vadd.f32 %v249, %v251
    %v253 = vmax.f32 %v252, 0.0
    %s254 = sld [smem:[#allocation10]]
    %v255 = vstv %s254
    %v256 = vmul.f32 %v129, %v255
    %s257 = sld [smem:[#allocation10 + $0x1]]
    %v258 = vstv %s257
    %v259 = vmul.f32 %v160, %v258
    %v260 = vadd.f32 %v256, %v259
    %s261 = sld [smem:[#allocation10 + $0x2]]
    %v262 = vstv %s261
    %v263 = vmul.f32 %v191, %v262
    %v264 = vadd.f32 %v260, %v263
    %s265 = sld [smem:[#allocation10 + $0x3]]
    %v266 = vstv %s265
    %v267 = vmul.f32 %v222, %v266
    %v268 = vadd.f32 %v264, %v267
    %s269 = sld [smem:[#allocation10 + $0x4]]
    %v270 = vstv %s269
    %v271 = vmul.f32 %v253, %v270
    %v272 = vadd.f32 %v268, %v271
    %s273 = sld [smem:[#allocation11]]
    %v274 = vstv %s273
    %v275 = vadd.f32 %v272, %v274
    %276 = vst [vmem:[#allocation13] sm:$0xff] %v275
    %s277 = sld [smem:[#allocation10 + $0x80]]
    %v278 = vstv %s277
    %v279 = vmul.f32 %v129, %v278
    %s280 = sld [smem:[#allocation10 + $0x81]]
    %v281 = vstv %s280
    %v282 = vmul.f32 %v160, %v281
    %v283 = vadd.f32 %v279, %v282
    %s284 = sld [smem:[#allocation10 + $0x82]]
    %v285 = vstv %s284
    %v286 = vmul.f32 %v191, %v285
    %v287 = vadd.f32 %v283, %v286
    %s288 = sld [smem:[#allocation10 + $0x83]]
    %v289 = vstv %s288
    %v290 = vmul.f32 %v222, %v289
    %v291 = vadd.f32 %v287, %v290
    %s292 = sld [smem:[#allocation10 + $0x84]]
    %v293 = vstv %s292
    %v294 = vmul.f32 %v253, %v293
    %v295 = vadd.f32 %v291, %v294
    %s296 = sld [smem:[#allocation11 + $0x1]]
    %v297 = vstv %s296
    %v298 = vadd.f32 %v295, %v297
    %s299 = scalar_lea.vmem [#allocation13], 8
    %300 = vst [vmem:[%s299] sm:$0xff] %v298
    // Predicated region
    $region42: #{tpu_custom_call.1} parent=1 // pred_check
      _
    $region43: #{tpu_custom_call.1} parent=1 // pred_check_branch
      %302 = sbr.rel (0) target = $region45
    $region44: #{tpu_custom_call.1} parent=1 // pred_region
      %304 = vsyncadd [#allocation4], 0
      %s305 = sshll.u32 [#allocation13], 4
      %s306 = int_to_ptr.vmem [resolvable:$true] %s305
      %s307 = sshll.u32 %s5, 4
      %s308 = int_to_ptr.hbm [resolvable:$true] %s307
      %313 = dma.vmem_to_hbm [thread:$0]  %s306, 256, %s308, [#allocation4], 128, 128, 8
    $region45: #{tpu_custom_call.1} parent=1 // pred_fallthru
      _
    // Predicated region
    $region46: #{tpu_custom_call.1} parent=1 // pred_check
      _
    $region47: #{tpu_custom_call.1} parent=1 // pred_check_branch
      %315 = sbr.rel (0) target = $region49
    $region48: #{tpu_custom_call.1} parent=1 // pred_region
      %317 = dma.done [#allocation4], 256
    $region49: #{tpu_custom_call.1} parent=1 // pred_fallthru
      _
    %318 = vsyncpa [#allocation3], 1
    %319 = vsyncpa [#allocation4], 1
    %320 = vsyncpa [#allocation5], 1
    %321 = vsyncpa [#allocation9], 1
    %322 = vsyncpa [#allocation6], 1
    %323 = vsyncpa [#allocation12], 1

</llo_original>
